<compile_context>
chip_gen: v7x
topology: tpu7x:2x2x1
jax: 0.10.0
libtpu: 0.0.40
codegen_flags: <defaults>
</compile_context>

<pallas_src>
import math
from functools import partial

import jax
import jax.numpy as jnp
from jax.experimental import pallas as pl
from jax.experimental.pallas import tpu as pltpu

VMEM = pltpu.MemorySpace.VMEM
NHEAD = 8
LN_EPS = 1e-5


def _vmem_specs(n):
    return [pl.BlockSpec(memory_space=VMEM) for _ in range(n)]


def _layernorm(x, w, b):
    mu = jnp.mean(x, axis=-1, keepdims=True)
    xc = x - mu
    var = jnp.mean(xc * xc, axis=-1, keepdims=True)
    return xc * jax.lax.rsqrt(var + LN_EPS) * w + b


# ---------------------------------------------------------------------------
# Fused LSTM branch: (input_proj folded into gates) -> LSTM recurrence -> h_T
# ---------------------------------------------------------------------------
def _lstm_branch_kernel(T, B, x_ref, wcomb_ref, bcomb_ref, whh_ref, o_ref, gx_ref):
    # x_ref: (T*B, IN) time-major; wcomb: (IN, 4H); bcomb: (1, 4H); whh: (H, 4H)
    # gx_ref: VMEM scratch (T*B, 4H) holding the hoisted input->gate pre-activations.
    H = whh_ref.shape[0]

    # One big MXU pass: input_proj folded into the gate weights at init time.
    gx_ref[...] = (
        jnp.dot(x_ref[...], wcomb_ref[...], preferred_element_type=jnp.float32)
        + bcomb_ref[...]
    )
    whh = whh_ref[...]

    def step(t, carry):
        h, c = carry
        row = pl.multiple_of(t * B, B)
        g = gx_ref[pl.ds(row, B), :] + jnp.dot(
            h, whh, preferred_element_type=jnp.float32
        )
        # Gate columns pre-permuted to [i | f | o | g]:
        ifo = jax.nn.sigmoid(g[:, : 3 * H])        # one sigmoid over a contiguous 3H slice
        g_g = jnp.tanh(g[:, 3 * H:])               # one tanh over the last H slice
        i_g = ifo[:, 0:H]
        f_g = ifo[:, H:2 * H]
        o_g = ifo[:, 2 * H:3 * H]
        c = f_g * c + i_g * g_g
        h = o_g * jnp.tanh(c)
        return (h, c)

    h0 = jnp.zeros((B, H), jnp.float32)
    c0 = jnp.zeros((B, H), jnp.float32)
    # fori_loop keeps register pressure bounded; fully unroll only for small fixed T.
    h, _ = jax.lax.fori_loop(0, T, step, (h0, c0), unroll=(T <= 32))
    o_ref[...] = h  # == out[:, -1, :]


def lstm_branch(x_bti, params):
    B, T, IN = x_bti.shape
    H = params["w_hh_t"].shape[0]
    # Activation only: time-major rows so each step reads a contiguous B-row block.
    x_tm = jnp.transpose(x_bti, (1, 0, 2)).reshape(T * B, IN)
    # NOTE: at production batch sizes, add a batch-tiled grid with
    # dimension_semantics=("parallel",) to shard across v7x TensorCores.
    return pl.pallas_call(
        partial(_lstm_branch_kernel, T, B),
        out_shape=jax.ShapeDtypeStruct((B, H), jnp.float32),
        in_specs=_vmem_specs(4),
        out_specs=pl.BlockSpec(memory_space=VMEM),
        scratch_shapes=[pltpu.VMEM((T * B, 4 * H), jnp.float32)],
        compiler_params=pltpu.CompilerParams(vmem_limit_bytes=32 * 1024 * 1024),
    )(x_tm, params["w_comb"], params["b_comb"], params["w_hh_t"])


# ---------------------------------------------------------------------------
# Fused Transformer branch (time-major): input_proj -> +PE -> 3x encoder -> last step
# ---------------------------------------------------------------------------
def _transformer_branch_kernel(B, T, L,
                               x_ref, pw_ref, pb_ref, pe_ref, mh_ref, mht_ref,
                               wqkv_ref, bqkv_ref, wo_ref, bo_ref,
                               ln1w_ref, ln1b_ref, w1_ref, b1_ref,
                               w2_ref, b2_ref, ln2w_ref, ln2b_ref,
                               o_ref):
    # Time-major rows: row index = t*B + b.
    H = pw_ref.shape[1]
    TB = T * B
    mh = mh_ref[...]    # (H, NHEAD) head-indicator (per-head lane reduction)
    mht = mht_ref[...]  # (NHEAD, H) head-indicator transpose (per-head lane expansion)

    # input_proj + positional encoding (PE add = sublane broadcast over batch).
    h = jnp.dot(x_ref[...], pw_ref[...], preferred_element_type=jnp.float32) + pb_ref[...]
    h = (h.reshape(T, B, H) + pe_ref[...][:, None, :]).reshape(TB, H)
    # dropout omitted (eval mode)

    for li in range(L):  # static 3-layer loop
        # Fused Q/K/V projection; Q columns are pre-scaled by 1/sqrt(head_dim) at init.
        qkv = jnp.dot(h, wqkv_ref[li], preferred_element_type=jnp.float32) + bqkv_ref[li]
        q3 = qkv[:, 0:H].reshape(T, B, H)
        k3 = qkv[:, H:2 * H].reshape(T, B, H)
        v3 = qkv[:, 2 * H:].reshape(T, B, H)

        # All heads at once, no per-head slicing / concat / transposes:
        #   s[q,k,b,h] = sum_{d in head h} q3[q,b,d] * k3[k,b,d]
        qk = q3[:, None, :, :] * k3[None, :, :, :]                        # (Tq, Tk, B, H)
        s = jnp.dot(qk.reshape(T * T * B, H), mh,
                    preferred_element_type=jnp.float32).reshape(T, T, B, NHEAD)

        # softmax over keys (axis=1); divide via EUP reciprocal.
        s = s - jnp.max(s, axis=1, keepdims=True)
        p = jnp.exp(s)
        p = p * pl.reciprocal(jnp.sum(p, axis=1, keepdims=True), approx=True)

        # Broadcast per-head probs back to per-lane width and contract over keys:
        #   ctx[q,b,d] = sum_k p[q,k,b,head(d)] * v3[k,b,d]
        pexp = jnp.dot(p.reshape(T * T * B, NHEAD), mht,
                       preferred_element_type=jnp.float32).reshape(T, T, B, H)
        ctx = jnp.sum(pexp * v3[None, :, :, :], axis=1)                   # (Tq, B, H)
        attn = ctx.reshape(TB, H)

        attn = jnp.dot(attn, wo_ref[li], preferred_element_type=jnp.float32) + bo_ref[li]
        # post-norm encoder (PyTorch default norm_first=False); dropout = identity
        h = _layernorm(h + attn, ln1w_ref[li], ln1b_ref[li])

        ff = jnp.dot(h, w1_ref[li], preferred_element_type=jnp.float32) + b1_ref[li]
        ff = jnp.maximum(ff, 0.0)  # relu
        ff = jnp.dot(ff, w2_ref[li], preferred_element_type=jnp.float32) + b2_ref[li]
        h = _layernorm(h + ff, ln2w_ref[li], ln2b_ref[li])

    # Last timestep = contiguous final B rows of the time-major activation.
    o_ref[...] = h[(T - 1) * B:, :]


def transformer_branch(x_bti, params):
    B, T, IN = x_bti.shape
    H = params["proj_wt"].shape[1]
    L = params["wqkv"].shape[0]
    assert T <= params["pe"].shape[0]
    x_tm = jnp.transpose(x_bti, (1, 0, 2)).reshape(T * B, IN)  # time-major rows
    pe = params["pe"][:T]  # static slice of the precomputed PE table

    args = (
        x_tm, params["proj_wt"], params["proj_b2"], pe,
        params["head_mask"], params["head_mask_t"],
        params["wqkv"], params["bqkv"], params["wo"], params["bo"],
        params["ln1_w"], params["ln1_b"], params["w1"], params["b1"],
        params["w2"], params["b2"], params["ln2_w"], params["ln2_b"],
    )
    # NOTE: at production (B*T), tile rows with a grid + ("parallel",) semantics for
    # v7x megacore and to bound VMEM; at B=2, T=8 a single fused invocation is best.
    return pl.pallas_call(
        partial(_transformer_branch_kernel, B, T, L),
        out_shape=jax.ShapeDtypeStruct((B, H), jnp.float32),
        in_specs=_vmem_specs(len(args)),
        out_specs=pl.BlockSpec(memory_space=VMEM),
        compiler_params=pltpu.CompilerParams(vmem_limit_bytes=32 * 1024 * 1024),
    )(*args)


# ---------------------------------------------------------------------------
# Init-time parameter preparation (all weight massaging hoisted out of forward)
# ---------------------------------------------------------------------------
def make_pe(t, d):
    assert d % 2 == 0, "positional encoding assumes even d_model"
    pos = jnp.arange(t, dtype=jnp.float32)[:, None]
    div = jnp.exp(jnp.arange(0, d, 2, dtype=jnp.float32) * (-math.log(10000.0) / d))
    ang = pos * div
    pe = jnp.zeros((t, d), jnp.float32)
    pe = pe.at[:, 0::2].set(jnp.sin(ang))
    pe = pe.at[:, 1::2].set(jnp.cos(ang))
    return pe


def _prepare_lstm_params(raw, hidden_size):
    H = hidden_size
    # Reorder PyTorch gate order [i, f, g, o] -> [i, f, o, g].
    perm = jnp.concatenate([jnp.arange(0, 2 * H), jnp.arange(3 * H, 4 * H),
                            jnp.arange(2 * H, 3 * H)])
    w_ih = raw["w_ih"][perm]                      # (4H, H)
    w_hh = raw["w_hh"][perm]                      # (4H, H)
    bias = (raw["b_ih"] + raw["b_hh"])[perm]      # (4H,)
    # Fold input_proj into the gate matmul.
    w_comb = raw["proj_w"].T @ w_ih.T             # (IN, 4H)
    b_comb = (raw["proj_b"] @ w_ih.T + bias).reshape(1, 4 * H)
    return {
        "w_comb": w_comb.astype(jnp.float32),
        "b_comb": b_comb.astype(jnp.float32),
        "w_hh_t": w_hh.T.astype(jnp.float32),     # (H, 4H)
    }


def _prepare_transformer_params(raw, hidden_size, max_len=512):
    H = hidden_size
    L = raw["in_proj_w"].shape[0]
    FF = raw["lin1_w"].shape[1]
    HD = H // NHEAD
    scale = 1.0 / math.sqrt(HD)
    # Fold the 1/sqrt(head_dim) attention scale into the Q columns of the QKV weight.
    col_scale = jnp.concatenate([jnp.full((H,), scale, jnp.float32),
                                 jnp.ones((2 * H,), jnp.float32)])
    head_mask = (jnp.arange(H)[:, None] // HD
                 == jnp.arange(NHEAD)[None, :]).astype(jnp.float32)   # (H, NHEAD)
    return {
        "proj_wt": raw["proj_w"].T.astype(jnp.float32),               # (IN, H)
        "proj_b2": raw["proj_b"].reshape(1, H).astype(jnp.float32),
        "pe": make_pe(max_len, H),
        "head_mask": head_mask,
        "head_mask_t": head_mask.T,
        "wqkv": (jnp.transpose(raw["in_proj_w"], (0, 2, 1)) * col_scale).astype(jnp.float32),
        "bqkv": (raw["in_proj_b"] * col_scale).reshape(L, 1, 3 * H).astype(jnp.float32),
        "wo": jnp.transpose(raw["out_proj_w"], (0, 2, 1)).astype(jnp.float32),
        "bo": raw["out_proj_b"].reshape(L, 1, H).astype(jnp.float32),
        "ln1_w": raw["ln1_w"].reshape(L, 1, H), "ln1_b": raw["ln1_b"].reshape(L, 1, H),
        "w1": jnp.transpose(raw["lin1_w"], (0, 2, 1)).astype(jnp.float32),   # (L, H, FF)
        "b1": raw["lin1_b"].reshape(L, 1, FF).astype(jnp.float32),
        "w2": jnp.transpose(raw["lin2_w"], (0, 2, 1)).astype(jnp.float32),   # (L, FF, H)
        "b2": raw["lin2_b"].reshape(L, 1, H).astype(jnp.float32),
        "ln2_w": raw["ln2_w"].reshape(L, 1, H), "ln2_b": raw["ln2_b"].reshape(L, 1, H),
    }


def init_params(key, input_size, hidden_size, branch_type, num_layers=3, dim_ff=128):
    keys = iter(jax.random.split(key, 32))

    def nrm(shape, scale=0.1):
        return (scale * jax.random.normal(next(keys), shape)).astype(jnp.float32)

    raw = {"proj_w": nrm((hidden_size, input_size)), "proj_b": nrm((hidden_size,))}
    if branch_type == "LSTM":
        raw.update(
            w_ih=nrm((4 * hidden_size, hidden_size)),
            w_hh=nrm((4 * hidden_size, hidden_size)),
            b_ih=nrm((4 * hidden_size,)),
            b_hh=nrm((4 * hidden_size,)),
        )
        return _prepare_lstm_params(raw, hidden_size)

    L = num_layers
    raw.update(
        # packed in_proj weight like PyTorch MultiheadAttention: [Wq; Wk; Wv]
        in_proj_w=nrm((L, 3 * hidden_size, hidden_size)),
        in_proj_b=nrm((L, 3 * hidden_size)),
        out_proj_w=nrm((L, hidden_size, hidden_size)),
        out_proj_b=nrm((L, hidden_size)),
        ln1_w=jnp.ones((L, hidden_size), jnp.float32),
        ln1_b=jnp.zeros((L, hidden_size), jnp.float32),
        lin1_w=nrm((L, dim_ff, hidden_size)),
        lin1_b=nrm((L, dim_ff)),
        lin2_w=nrm((L, hidden_size, dim_ff)),
        lin2_b=nrm((L, hidden_size)),
        ln2_w=jnp.ones((L, hidden_size), jnp.float32),
        ln2_b=jnp.zeros((L, hidden_size), jnp.float32),
    )
    return _prepare_transformer_params(raw, hidden_size)


def feature_branch_forward(params, x, branch_type):
    if branch_type == "LSTM":
        return lstm_branch(x, params)
    return transformer_branch(x, params)


if __name__ == "__main__":
    B, T, IN_SIZE, HIDDEN = 2, 8, 16, 32
    key = jax.random.PRNGKey(0)
    kx, kl, kt = jax.random.split(key, 3)
    x = jax.random.normal(kx, (B, T, IN_SIZE), dtype=jnp.float32)

    lstm_params = init_params(kl, IN_SIZE, HIDDEN, "LSTM")
    out_lstm = feature_branch_forward(lstm_params, x, "LSTM")

    tr_params = init_params(kt, IN_SIZE, HIDDEN, "Transformer")
    out_tr = feature_branch_forward(tr_params, x, "Transformer")

    jax.block_until_ready((out_lstm, out_tr))
    assert out_lstm.shape == (B, HIDDEN) and out_tr.shape == (B, HIDDEN)
    assert bool(jnp.all(jnp.isfinite(out_lstm))) and bool(jnp.all(jnp.isfinite(out_tr)))
    print("KERNEL_OK")
</pallas_src>

<mosaic_0001>
module attributes {stable_mosaic.version = 11 : i64} {
  func.func @_lstm_branch_kernel(%arg0: memref<16x16xf32, #tpu.memory_space<vmem>>, %arg1: memref<16x128xf32, #tpu.memory_space<vmem>>, %arg2: memref<1x128xf32, #tpu.memory_space<vmem>>, %arg3: memref<32x128xf32, #tpu.memory_space<vmem>>, %arg4: memref<2x32xf32, #tpu.memory_space<vmem>>, %arg5: memref<16x128xf32, #tpu.memory_space<vmem>>) attributes {dimension_semantics = [], scalar_prefetch = 0 : i64, scratch_operands = 1 : i64, tpu.core_type = #tpu.core_type<tc>} {
    %c0 = arith.constant 0 : index
    %c0_0 = arith.constant 0 : index
    %0 = vector.load %arg0[%c0, %c0_0] : memref<16x16xf32, #tpu.memory_space<vmem>>, vector<16x16xf32>
    %c0_1 = arith.constant 0 : index
    %c0_2 = arith.constant 0 : index
    %1 = vector.load %arg1[%c0_1, %c0_2] : memref<16x128xf32, #tpu.memory_space<vmem>>, vector<16x128xf32>
    %cst = arith.constant dense<0.000000e+00> : vector<16x128xf32>
    %2 = tpu.matmul %0, %1, %cst {dimension_numbers = #tpu.dot_dimension_numbers<[1], [0], [0], [1], [0, 0, 1, 1], [], []>} : vector<16x16xf32>, vector<16x128xf32>, vector<16x128xf32> -> vector<16x128xf32>
    %c0_3 = arith.constant 0 : index
    %c0_4 = arith.constant 0 : index
    %3 = vector.load %arg2[%c0_3, %c0_4] : memref<1x128xf32, #tpu.memory_space<vmem>>, vector<1x128xf32>
    %4 = vector.broadcast %3 : vector<1x128xf32> to vector<16x128xf32>
    %5 = arith.addf %2, %4 : vector<16x128xf32>
    %c0_5 = arith.constant 0 : index
    %c0_6 = arith.constant 0 : index
    %6 = vector.load %arg5[%c0_5, %c0_6] : memref<16x128xf32, #tpu.memory_space<vmem>>, vector<16x128xf32>
    tpu.vector_store %arg5[%c0_5, %c0_6], %5 {strides = array<i32>} : memref<16x128xf32, #tpu.memory_space<vmem>>, vector<16x128xf32>,
    %c0_7 = arith.constant 0 : index
    %c0_8 = arith.constant 0 : index
    %7 = vector.load %arg3[%c0_7, %c0_8] : memref<32x128xf32, #tpu.memory_space<vmem>>, vector<32x128xf32>
    %cst_9 = arith.constant 0.000000e+00 : f32
    %8 = vector.broadcast %cst_9 : f32 to vector<2x32xf32>
    %cst_10 = arith.constant 0.000000e+00 : f32
    %9 = vector.broadcast %cst_10 : f32 to vector<2x32xf32>
    %c0_i32 = arith.constant 0 : i32
    %c2_i32 = arith.constant 2 : i32
    %10 = arith.muli %c0_i32, %c2_i32 : i32
    %11 = tpu.assume_multiple %10, 2 : i32
    %12 = arith.index_cast %11 : i32 to index
    %c0_11 = arith.constant 0 : index
    %13 = vector.load %arg5[%12, %c0_11] : memref<16x128xf32, #tpu.memory_space<vmem>>, vector<2x128xf32>
    %cst_12 = arith.constant dense<0.000000e+00> : vector<2x128xf32>
    %14 = tpu.matmul %8, %7, %cst_12 {dimension_numbers = #tpu.dot_dimension_numbers<[1], [0], [0], [1], [0, 0, 1, 1], [], []>} : vector<2x32xf32>, vector<32x128xf32>, vector<2x128xf32> -> vector<2x128xf32>
    %15 = arith.addf %13, %14 : vector<2x128xf32>
    %16 = vector.extract_strided_slice %15 {offsets = [0, 0], sizes = [2, 96], strides = [1, 1]} : vector<2x128xf32> to vector<2x96xf32>
    %17 = arith.negf %16 : vector<2x96xf32>
    %18 = math.exp %17 : vector<2x96xf32>
    %cst_13 = arith.constant 1.000000e+00 : f32
    %19 = vector.broadcast %cst_13 : f32 to vector<2x96xf32>
    %20 = arith.addf %19, %18 : vector<2x96xf32>
    %21 = arith.divf %19, %20 : vector<2x96xf32>
    %22 = vector.extract_strided_slice %15 {offsets = [0, 96], sizes = [2, 32], strides = [1, 1]} : vector<2x128xf32> to vector<2x32xf32>
    %23 = math.tanh %22 : vector<2x32xf32>
    %24 = vector.extract_strided_slice %21 {offsets = [0, 0], sizes = [2, 32], strides = [1, 1]} : vector<2x96xf32> to vector<2x32xf32>
    %25 = vector.extract_strided_slice %21 {offsets = [0, 32], sizes = [2, 32], strides = [1, 1]} : vector<2x96xf32> to vector<2x32xf32>
    %26 = vector.extract_strided_slice %21 {offsets = [0, 64], sizes = [2, 32], strides = [1, 1]} : vector<2x96xf32> to vector<2x32xf32>
    %27 = arith.mulf %25, %9 : vector<2x32xf32>
    %28 = arith.mulf %24, %23 : vector<2x32xf32>
    %29 = arith.addf %27, %28 : vector<2x32xf32>
    %30 = math.tanh %29 : vector<2x32xf32>
    %31 = arith.mulf %26, %30 : vector<2x32xf32>
    %c1_i32 = arith.constant 1 : i32
    %c2_i32_14 = arith.constant 2 : i32
    %32 = arith.muli %c1_i32, %c2_i32_14 : i32
    %33 = tpu.assume_multiple %32, 2 : i32
    %34 = arith.index_cast %33 : i32 to index
    %c0_15 = arith.constant 0 : index
    %35 = vector.load %arg5[%34, %c0_15] : memref<16x128xf32, #tpu.memory_space<vmem>>, vector<2x128xf32>
    %cst_16 = arith.constant dense<0.000000e+00> : vector<2x128xf32>
    %36 = tpu.matmul %31, %7, %cst_16 {dimension_numbers = #tpu.dot_dimension_numbers<[1], [0], [0], [1], [0, 0, 1, 1], [], []>} : vector<2x32xf32>, vector<32x128xf32>, vector<2x128xf32> -> vector<2x128xf32>
    %37 = arith.addf %35, %36 : vector<2x128xf32>
    %38 = vector.extract_strided_slice %37 {offsets = [0, 0], sizes = [2, 96], strides = [1, 1]} : vector<2x128xf32> to vector<2x96xf32>
    %39 = arith.negf %38 : vector<2x96xf32>
    %40 = math.exp %39 : vector<2x96xf32>
    %cst_17 = arith.constant 1.000000e+00 : f32
    %41 = vector.broadcast %cst_17 : f32 to vector<2x96xf32>
    %42 = arith.addf %41, %40 : vector<2x96xf32>
    %43 = arith.divf %41, %42 : vector<2x96xf32>
    %44 = vector.extract_strided_slice %37 {offsets = [0, 96], sizes = [2, 32], strides = [1, 1]} : vector<2x128xf32> to vector<2x32xf32>
    %45 = math.tanh %44 : vector<2x32xf32>
    %46 = vector.extract_strided_slice %43 {offsets = [0, 0], sizes = [2, 32], strides = [1, 1]} : vector<2x96xf32> to vector<2x32xf32>
    %47 = vector.extract_strided_slice %43 {offsets = [0, 32], sizes = [2, 32], strides = [1, 1]} : vector<2x96xf32> to vector<2x32xf32>
    %48 = vector.extract_strided_slice %43 {offsets = [0, 64], sizes = [2, 32], strides = [1, 1]} : vector<2x96xf32> to vector<2x32xf32>
    %49 = arith.mulf %47, %29 : vector<2x32xf32>
    %50 = arith.mulf %46, %45 : vector<2x32xf32>
    %51 = arith.addf %49, %50 : vector<2x32xf32>
    %52 = math.tanh %51 : vector<2x32xf32>
    %53 = arith.mulf %48, %52 : vector<2x32xf32>
    %c2_i32_18 = arith.constant 2 : i32
    %c2_i32_19 = arith.constant 2 : i32
    %54 = arith.muli %c2_i32_18, %c2_i32_19 : i32
    %55 = tpu.assume_multiple %54, 2 : i32
    %56 = arith.index_cast %55 : i32 to index
    %c0_20 = arith.constant 0 : index
    %57 = vector.load %arg5[%56, %c0_20] : memref<16x128xf32, #tpu.memory_space<vmem>>, vector<2x128xf32>
    %cst_21 = arith.constant dense<0.000000e+00> : vector<2x128xf32>
    %58 = tpu.matmul %53, %7, %cst_21 {dimension_numbers = #tpu.dot_dimension_numbers<[1], [0], [0], [1], [0, 0, 1, 1], [], []>} : vector<2x32xf32>, vector<32x128xf32>, vector<2x128xf32> -> vector<2x128xf32>
    %59 = arith.addf %57, %58 : vector<2x128xf32>
    %60 = vector.extract_strided_slice %59 {offsets = [0, 0], sizes = [2, 96], strides = [1, 1]} : vector<2x128xf32> to vector<2x96xf32>
    %61 = arith.negf %60 : vector<2x96xf32>
    %62 = math.exp %61 : vector<2x96xf32>
    %cst_22 = arith.constant 1.000000e+00 : f32
    %63 = vector.broadcast %cst_22 : f32 to vector<2x96xf32>
    %64 = arith.addf %63, %62 : vector<2x96xf32>
    %65 = arith.divf %63, %64 : vector<2x96xf32>
    %66 = vector.extract_strided_slice %59 {offsets = [0, 96], sizes = [2, 32], strides = [1, 1]} : vector<2x128xf32> to vector<2x32xf32>
    %67 = math.tanh %66 : vector<2x32xf32>
    %68 = vector.extract_strided_slice %65 {offsets = [0, 0], sizes = [2, 32], strides = [1, 1]} : vector<2x96xf32> to vector<2x32xf32>
    %69 = vector.extract_strided_slice %65 {offsets = [0, 32], sizes = [2, 32], strides = [1, 1]} : vector<2x96xf32> to vector<2x32xf32>
    %70 = vector.extract_strided_slice %65 {offsets = [0, 64], sizes = [2, 32], strides = [1, 1]} : vector<2x96xf32> to vector<2x32xf32>
    %71 = arith.mulf %69, %51 : vector<2x32xf32>
    %72 = arith.mulf %68, %67 : vector<2x32xf32>
    %73 = arith.addf %71, %72 : vector<2x32xf32>
    %74 = math.tanh %73 : vector<2x32xf32>
    %75 = arith.mulf %70, %74 : vector<2x32xf32>
    %c3_i32 = arith.constant 3 : i32
    %c2_i32_23 = arith.constant 2 : i32
    %76 = arith.muli %c3_i32, %c2_i32_23 : i32
    %77 = tpu.assume_multiple %76, 2 : i32
    %78 = arith.index_cast %77 : i32 to index
    %c0_24 = arith.constant 0 : index
    %79 = vector.load %arg5[%78, %c0_24] : memref<16x128xf32, #tpu.memory_space<vmem>>, vector<2x128xf32>
    %cst_25 = arith.constant dense<0.000000e+00> : vector<2x128xf32>
    %80 = tpu.matmul %75, %7, %cst_25 {dimension_numbers = #tpu.dot_dimension_numbers<[1], [0], [0], [1], [0, 0, 1, 1], [], []>} : vector<2x32xf32>, vector<32x128xf32>, vector<2x128xf32> -> vector<2x128xf32>
    %81 = arith.addf %79, %80 : vector<2x128xf32>
    %82 = vector.extract_strided_slice %81 {offsets = [0, 0], sizes = [2, 96], strides = [1, 1]} : vector<2x128xf32> to vector<2x96xf32>
    %83 = arith.negf %82 : vector<2x96xf32>
    %84 = math.exp %83 : vector<2x96xf32>
    %cst_26 = arith.constant 1.000000e+00 : f32
    %85 = vector.broadcast %cst_26 : f32 to vector<2x96xf32>
    %86 = arith.addf %85, %84 : vector<2x96xf32>
    %87 = arith.divf %85, %86 : vector<2x96xf32>
    %88 = vector.extract_strided_slice %81 {offsets = [0, 96], sizes = [2, 32], strides = [1, 1]} : vector<2x128xf32> to vector<2x32xf32>
    %89 = math.tanh %88 : vector<2x32xf32>
    %90 = vector.extract_strided_slice %87 {offsets = [0, 0], sizes = [2, 32], strides = [1, 1]} : vector<2x96xf32> to vector<2x32xf32>
    %91 = vector.extract_strided_slice %87 {offsets = [0, 32], sizes = [2, 32], strides = [1, 1]} : vector<2x96xf32> to vector<2x32xf32>
    %92 = vector.extract_strided_slice %87 {offsets = [0, 64], sizes = [2, 32], strides = [1, 1]} : vector<2x96xf32> to vector<2x32xf32>
    %93 = arith.mulf %91, %73 : vector<2x32xf32>
    %94 = arith.mulf %90, %89 : vector<2x32xf32>
    %95 = arith.addf %93, %94 : vector<2x32xf32>
    %96 = math.tanh %95 : vector<2x32xf32>
    %97 = arith.mulf %92, %96 : vector<2x32xf32>
    %c4_i32 = arith.constant 4 : i32
    %c2_i32_27 = arith.constant 2 : i32
    %98 = arith.muli %c4_i32, %c2_i32_27 : i32
    %99 = tpu.assume_multiple %98, 2 : i32
    %100 = arith.index_cast %99 : i32 to index
    %c0_28 = arith.constant 0 : index
    %101 = vector.load %arg5[%100, %c0_28] : memref<16x128xf32, #tpu.memory_space<vmem>>, vector<2x128xf32>
    %cst_29 = arith.constant dense<0.000000e+00> : vector<2x128xf32>
    %102 = tpu.matmul %97, %7, %cst_29 {dimension_numbers = #tpu.dot_dimension_numbers<[1], [0], [0], [1], [0, 0, 1, 1], [], []>} : vector<2x32xf32>, vector<32x128xf32>, vector<2x128xf32> -> vector<2x128xf32>
    %103 = arith.addf %101, %102 : vector<2x128xf32>
    %104 = vector.extract_strided_slice %103 {offsets = [0, 0], sizes = [2, 96], strides = [1, 1]} : vector<2x128xf32> to vector<2x96xf32>
    %105 = arith.negf %104 : vector<2x96xf32>
    %106 = math.exp %105 : vector<2x96xf32>
    %cst_30 = arith.constant 1.000000e+00 : f32
    %107 = vector.broadcast %cst_30 : f32 to vector<2x96xf32>
    %108 = arith.addf %107, %106 : vector<2x96xf32>
    %109 = arith.divf %107, %108 : vector<2x96xf32>
    %110 = vector.extract_strided_slice %103 {offsets = [0, 96], sizes = [2, 32], strides = [1, 1]} : vector<2x128xf32> to vector<2x32xf32>
    %111 = math.tanh %110 : vector<2x32xf32>
    %112 = vector.extract_strided_slice %109 {offsets = [0, 0], sizes = [2, 32], strides = [1, 1]} : vector<2x96xf32> to vector<2x32xf32>
    %113 = vector.extract_strided_slice %109 {offsets = [0, 32], sizes = [2, 32], strides = [1, 1]} : vector<2x96xf32> to vector<2x32xf32>
    %114 = vector.extract_strided_slice %109 {offsets = [0, 64], sizes = [2, 32], strides = [1, 1]} : vector<2x96xf32> to vector<2x32xf32>
    %115 = arith.mulf %113, %95 : vector<2x32xf32>
    %116 = arith.mulf %112, %111 : vector<2x32xf32>
    %117 = arith.addf %115, %116 : vector<2x32xf32>
    %118 = math.tanh %117 : vector<2x32xf32>
    %119 = arith.mulf %114, %118 : vector<2x32xf32>
    %c5_i32 = arith.constant 5 : i32
    %c2_i32_31 = arith.constant 2 : i32
    %120 = arith.muli %c5_i32, %c2_i32_31 : i32
    %121 = tpu.assume_multiple %120, 2 : i32
    %122 = arith.index_cast %121 : i32 to index
    %c0_32 = arith.constant 0 : index
    %123 = vector.load %arg5[%122, %c0_32] : memref<16x128xf32, #tpu.memory_space<vmem>>, vector<2x128xf32>
    %cst_33 = arith.constant dense<0.000000e+00> : vector<2x128xf32>
    %124 = tpu.matmul %119, %7, %cst_33 {dimension_numbers = #tpu.dot_dimension_numbers<[1], [0], [0], [1], [0, 0, 1, 1], [], []>} : vector<2x32xf32>, vector<32x128xf32>, vector<2x128xf32> -> vector<2x128xf32>
    %125 = arith.addf %123, %124 : vector<2x128xf32>
    %126 = vector.extract_strided_slice %125 {offsets = [0, 0], sizes = [2, 96], strides = [1, 1]} : vector<2x128xf32> to vector<2x96xf32>
    %127 = arith.negf %126 : vector<2x96xf32>
    %128 = math.exp %127 : vector<2x96xf32>
    %cst_34 = arith.constant 1.000000e+00 : f32
    %129 = vector.broadcast %cst_34 : f32 to vector<2x96xf32>
    %130 = arith.addf %129, %128 : vector<2x96xf32>
    %131 = arith.divf %129, %130 : vector<2x96xf32>
    %132 = vector.extract_strided_slice %125 {offsets = [0, 96], sizes = [2, 32], strides = [1, 1]} : vector<2x128xf32> to vector<2x32xf32>
    %133 = math.tanh %132 : vector<2x32xf32>
    %134 = vector.extract_strided_slice %131 {offsets = [0, 0], sizes = [2, 32], strides = [1, 1]} : vector<2x96xf32> to vector<2x32xf32>
    %135 = vector.extract_strided_slice %131 {offsets = [0, 32], sizes = [2, 32], strides = [1, 1]} : vector<2x96xf32> to vector<2x32xf32>
    %136 = vector.extract_strided_slice %131 {offsets = [0, 64], sizes = [2, 32], strides = [1, 1]} : vector<2x96xf32> to vector<2x32xf32>
    %137 = arith.mulf %135, %117 : vector<2x32xf32>
    %138 = arith.mulf %134, %133 : vector<2x32xf32>
    %139 = arith.addf %137, %138 : vector<2x32xf32>
    %140 = math.tanh %139 : vector<2x32xf32>
    %141 = arith.mulf %136, %140 : vector<2x32xf32>
    %c6_i32 = arith.constant 6 : i32
    %c2_i32_35 = arith.constant 2 : i32
    %142 = arith.muli %c6_i32, %c2_i32_35 : i32
    %143 = tpu.assume_multiple %142, 2 : i32
    %144 = arith.index_cast %143 : i32 to index
    %c0_36 = arith.constant 0 : index
    %145 = vector.load %arg5[%144, %c0_36] : memref<16x128xf32, #tpu.memory_space<vmem>>, vector<2x128xf32>
    %cst_37 = arith.constant dense<0.000000e+00> : vector<2x128xf32>
    %146 = tpu.matmul %141, %7, %cst_37 {dimension_numbers = #tpu.dot_dimension_numbers<[1], [0], [0], [1], [0, 0, 1, 1], [], []>} : vector<2x32xf32>, vector<32x128xf32>, vector<2x128xf32> -> vector<2x128xf32>
    %147 = arith.addf %145, %146 : vector<2x128xf32>
    %148 = vector.extract_strided_slice %147 {offsets = [0, 0], sizes = [2, 96], strides = [1, 1]} : vector<2x128xf32> to vector<2x96xf32>
    %149 = arith.negf %148 : vector<2x96xf32>
    %150 = math.exp %149 : vector<2x96xf32>
    %cst_38 = arith.constant 1.000000e+00 : f32
    %151 = vector.broadcast %cst_38 : f32 to vector<2x96xf32>
    %152 = arith.addf %151, %150 : vector<2x96xf32>
    %153 = arith.divf %151, %152 : vector<2x96xf32>
    %154 = vector.extract_strided_slice %147 {offsets = [0, 96], sizes = [2, 32], strides = [1, 1]} : vector<2x128xf32> to vector<2x32xf32>
    %155 = math.tanh %154 : vector<2x32xf32>
    %156 = vector.extract_strided_slice %153 {offsets = [0, 0], sizes = [2, 32], strides = [1, 1]} : vector<2x96xf32> to vector<2x32xf32>
    %157 = vector.extract_strided_slice %153 {offsets = [0, 32], sizes = [2, 32], strides = [1, 1]} : vector<2x96xf32> to vector<2x32xf32>
    %158 = vector.extract_strided_slice %153 {offsets = [0, 64], sizes = [2, 32], strides = [1, 1]} : vector<2x96xf32> to vector<2x32xf32>
    %159 = arith.mulf %157, %139 : vector<2x32xf32>
    %160 = arith.mulf %156, %155 : vector<2x32xf32>
    %161 = arith.addf %159, %160 : vector<2x32xf32>
    %162 = math.tanh %161 : vector<2x32xf32>
    %163 = arith.mulf %158, %162 : vector<2x32xf32>
    %c7_i32 = arith.constant 7 : i32
    %c2_i32_39 = arith.constant 2 : i32
    %164 = arith.muli %c7_i32, %c2_i32_39 : i32
    %165 = tpu.assume_multiple %164, 2 : i32
    %166 = arith.index_cast %165 : i32 to index
    %c0_40 = arith.constant 0 : index
    %167 = vector.load %arg5[%166, %c0_40] : memref<16x128xf32, #tpu.memory_space<vmem>>, vector<2x128xf32>
    %cst_41 = arith.constant dense<0.000000e+00> : vector<2x128xf32>
    %168 = tpu.matmul %163, %7, %cst_41 {dimension_numbers = #tpu.dot_dimension_numbers<[1], [0], [0], [1], [0, 0, 1, 1], [], []>} : vector<2x32xf32>, vector<32x128xf32>, vector<2x128xf32> -> vector<2x128xf32>
    %169 = arith.addf %167, %168 : vector<2x128xf32>
    %170 = vector.extract_strided_slice %169 {offsets = [0, 0], sizes = [2, 96], strides = [1, 1]} : vector<2x128xf32> to vector<2x96xf32>
    %171 = arith.negf %170 : vector<2x96xf32>
    %172 = math.exp %171 : vector<2x96xf32>
    %cst_42 = arith.constant 1.000000e+00 : f32
    %173 = vector.broadcast %cst_42 : f32 to vector<2x96xf32>
    %174 = arith.addf %173, %172 : vector<2x96xf32>
    %175 = arith.divf %173, %174 : vector<2x96xf32>
    %176 = vector.extract_strided_slice %169 {offsets = [0, 96], sizes = [2, 32], strides = [1, 1]} : vector<2x128xf32> to vector<2x32xf32>
    %177 = math.tanh %176 : vector<2x32xf32>
    %178 = vector.extract_strided_slice %175 {offsets = [0, 0], sizes = [2, 32], strides = [1, 1]} : vector<2x96xf32> to vector<2x32xf32>
    %179 = vector.extract_strided_slice %175 {offsets = [0, 32], sizes = [2, 32], strides = [1, 1]} : vector<2x96xf32> to vector<2x32xf32>
    %180 = vector.extract_strided_slice %175 {offsets = [0, 64], sizes = [2, 32], strides = [1, 1]} : vector<2x96xf32> to vector<2x32xf32>
    %181 = arith.mulf %179, %161 : vector<2x32xf32>
    %182 = arith.mulf %178, %177 : vector<2x32xf32>
    %183 = arith.addf %181, %182 : vector<2x32xf32>
    %184 = math.tanh %183 : vector<2x32xf32>
    %185 = arith.mulf %180, %184 : vector<2x32xf32>
    %c8_i32 = arith.constant 8 : i32
    %c0_43 = arith.constant 0 : index
    %c0_44 = arith.constant 0 : index
    %186 = vector.load %arg4[%c0_43, %c0_44] : memref<2x32xf32, #tpu.memory_space<vmem>>, vector<2x32xf32>
    tpu.vector_store %arg4[%c0_43, %c0_44], %185 {strides = array<i32>} : memref<2x32xf32, #tpu.memory_space<vmem>>, vector<2x32xf32>,
    return
  }
}

</mosaic_0001>

<llo_original>
// kernel: tpu_custom_call.1
$region0: #{tpu_custom_call.1}
  #allocation0 [shape = 'u32[]', space=smem, size = 0x4, offset = 0x4, fixed_abs, tag = 'smem constant byte address 0x4 - core index']
  #allocation1 [shape = 'u32[144,128]{1,0:T(1,128)}', space=vmem, size = 0x12000, scoped, tag = 'internal scratch']
  #allocation2 [shape = 'f32[16,128]{1,0:T(8,128)}', space=vmem, size = 0x2000, scoped, tag = 'scratch operand']
  %s0 = inlined_call_operand.hbm [shape: f32[16,16], index: 0, kind: input, shape index: {}]
  %s1 = inlined_call_operand.hbm [shape: f32[16,128], index: 1, kind: input, shape index: {}]
  %s2 = inlined_call_operand.vmem [shape: f32[1,128], index: 2, kind: input, shape index: {}]
  %s3 = inlined_call_operand.hbm [shape: f32[32,128], index: 3, kind: input, shape index: {}]
  %s4 = inlined_call_operand.hbm [shape: f32[2,32], index: 4, kind: output, shape index: {}]
  %s5 = sld [smem:[#allocation0]]
  $region38: #{tpu_custom_call.1} parent=0
    _
  %s7 = ssub.s32 1, %s5
  %s8 = scalar_select 0, %s7, %s5
  $region1: #{tpu_custom_call.1} parent=0
    #allocation3 [shape = 'u8[8192]{0}', space=vmem, size = 0x2000, scoped, tag = 'input window, operand 0, single buffered']
    #allocation4 [shape = 's32[1]{0}', space=sflag, size = 0x4, scoped, tag = 'scoped memory for tpu_custom_call.1']
    #allocation5 [shape = 's32[1]{0}', space=sflag, size = 0x4, scoped, tag = 'scoped memory for tpu_custom_call.1']
    #allocation6 [shape = 'u8[8192]{0}', space=vmem, size = 0x2000, scoped, tag = 'input window, operand 1, single buffered']
    #allocation7 [shape = 's32[1]{0}', space=sflag, size = 0x4, scoped, tag = 'scoped memory for tpu_custom_call.1']
    #allocation8 [shape = 'u8[16384]{0}', space=vmem, size = 0x4000, scoped, tag = 'input window, operand 3, single buffered']
    #allocation9 [shape = 'u8[1024]{0}', space=vmem, size = 0x400, scoped, tag = 'output window, operand 0, single buffered']
    %9 = vsyncpa [#allocation4], 0
    %10 = vsyncpa [#allocation7], 0
    %11 = vsyncpa [#allocation5], 0
    // Predicated region
    $region2: #{tpu_custom_call.1} parent=1 // pred_check
      _
    $region3: #{tpu_custom_call.1} parent=1 // pred_check_branch
      %13 = sbr.rel (0) target = $region5
    $region4: #{tpu_custom_call.1} parent=1 // pred_region
      %s15 = ssub.s32 256, 256
      %16 = vsyncadd [#allocation4], %s15
      %s17 = sshll.u32 [#allocation3], 4
      %s18 = int_to_ptr.vmem [resolvable:$true] %s17
      %23 = dma.hbm_to_vmem [thread:$0]  %s0, 256, %s18, [#allocation4], 128, 128, 8
    $region5: #{tpu_custom_call.1} parent=1 // pred_fallthru
      _
    // Predicated region
    $region6: #{tpu_custom_call.1} parent=1 // pred_check
      _
    $region7: #{tpu_custom_call.1} parent=1 // pred_check_branch
      %25 = sbr.rel (0) target = $region9
    $region8: #{tpu_custom_call.1} parent=1 // pred_region
      %s27 = ssub.s32 256, 256
      %28 = vsyncadd [#allocation7], %s27
      %s29 = sshll.u32 [#allocation6], 4
      %s30 = int_to_ptr.vmem [resolvable:$true] %s29
      %35 = dma.hbm_to_vmem [thread:$0]  %s1, 256, %s30, [#allocation7], 128, 128, 8
    $region9: #{tpu_custom_call.1} parent=1 // pred_fallthru
      _
    // Predicated region
    $region10: #{tpu_custom_call.1} parent=1 // pred_check
      _
    $region11: #{tpu_custom_call.1} parent=1 // pred_check_branch
      %37 = sbr.rel (0) target = $region13
    $region12: #{tpu_custom_call.1} parent=1 // pred_region
      _
    $region13: #{tpu_custom_call.1} parent=1 // pred_fallthru
      _
    // Predicated region
    $region14: #{tpu_custom_call.1} parent=1 // pred_check
      _
    $region15: #{tpu_custom_call.1} parent=1 // pred_check_branch
      %39 = sbr.rel (0) target = $region17
    $region16: #{tpu_custom_call.1} parent=1 // pred_region
      %s41 = ssub.s32 512, 512
      %42 = vsyncadd [#allocation7], %s41
      %s43 = sshll.u32 [#allocation8], 4
      %s44 = int_to_ptr.vmem [resolvable:$true] %s43
      %49 = dma.hbm_to_vmem [thread:$0]  %s3, 512, %s44, [#allocation7], 128, 128, 8
    $region17: #{tpu_custom_call.1} parent=1 // pred_fallthru
      _
    // Predicated region
    $region18: #{tpu_custom_call.1} parent=1 // pred_check
      _
    $region19: #{tpu_custom_call.1} parent=1 // pred_check_branch
      %51 = sbr.rel (0) target = $region21
    $region20: #{tpu_custom_call.1} parent=1 // pred_region
      %52 = dma.done [#allocation4], 256
    $region21: #{tpu_custom_call.1} parent=1 // pred_fallthru
      _
    // Predicated region
    $region22: #{tpu_custom_call.1} parent=1 // pred_check
      _
    $region23: #{tpu_custom_call.1} parent=1 // pred_check_branch
      %54 = sbr.rel (0) target = $region25
    $region24: #{tpu_custom_call.1} parent=1 // pred_region
      %55 = dma.done [#allocation7], 256
    $region25: #{tpu_custom_call.1} parent=1 // pred_fallthru
      _
    // Predicated region
    $region26: #{tpu_custom_call.1} parent=1 // pred_check
      _
    $region27: #{tpu_custom_call.1} parent=1 // pred_check_branch
      %57 = sbr.rel (0) target = $region29
    $region28: #{tpu_custom_call.1} parent=1 // pred_region
      %58 = dma.done [#allocation7], 512
    $region29: #{tpu_custom_call.1} parent=1 // pred_fallthru
      _
    %v59 = vld [vmem:[#allocation3] sm:$0xff]
    %v60 = vld [vmem:[#allocation3 + $0x8] sm:$0xff]
    %v61 = vld [vmem:[#allocation6] sm:$0xff]
    %v62 = vld [vmem:[#allocation6 + $0x8] sm:$0xff]
    %v63 = vld [vmem:[%s2] sm:$0x1]
    %v65 = vlaneseq
    %v66 = vshrl.u32 %v65, 7
    %v67 = vsub.s32 0, %v66
    %v68 = vrot.slane %v63, %v67
    %vm70 = vcmask 130048
    %v72 = vsel %vm70, %v59, 0
    %v75 = vsel %vm70, %v60, 0
    %77 = vmatprep.subr.mxu0 0.0
    %78 = vmatpush1.msra.mxu0 %v61
    %79 = vmatprep.subr.mxu0 0.0
    %80 = vmatpush1.msra.mxu0 %v62
    %81 = vmatprep.subr.mxu0 0.0
    %82 = vmatpush1.msra.mxu0 0.0
    %83 = vmatprep.subr.mxu0 0.0
    %84 = vmatpush1.msra.mxu0 0.0
    %85 = vmatprep.subr.mxu0 0.0
    %86 = vmatpush1.msra.mxu0 0.0
    %87 = vmatprep.subr.mxu0 0.0
    %88 = vmatpush1.msra.mxu0 0.0
    %89 = vmatprep.subr.mxu0 0.0
    %90 = vmatpush1.msra.mxu0 0.0
    %91 = vmatprep.subr.mxu0 0.0
    %92 = vmatpush1.msra.mxu0 0.0
    %93 = vmatprep.subr.mxu0 0.0
    %94 = vmatpush1.msra.mxu0 0.0
    %95 = vmatprep.subr.mxu0 0.0
    %96 = vmatpush1.msra.mxu0 0.0
    %97 = vmatprep.subr.mxu0 0.0
    %98 = vmatpush1.msra.mxu0 0.0
    %99 = vmatprep.subr.mxu0 0.0
    %100 = vmatpush1.msra.mxu0 0.0
    %101 = vmatprep.subr.mxu0 0.0
    %102 = vmatpush1.msra.mxu0 0.0
    %103 = vmatprep.subr.mxu0 0.0
    %104 = vmatpush1.msra.mxu0 0.0
    %105 = vmatprep.subr.mxu0 0.0
    %106 = vmatpush1.msra.mxu0 0.0
    %107 = vmatprep.subr.mxu0 0.0
    %108 = vmatpush1.msra.mxu0 0.0
    %109 = vmatprep.subr.mxu0 0.0
    %110 = vmatpush1.msra.mxu0 0.0
    %111 = vmatprep.subr.mxu0 0.0
    %112 = vmatpush1.msra.mxu0 0.0
    %113 = vmatprep.subr.mxu0 0.0
    %114 = vmatpush1.msra.mxu0 0.0
    %115 = vmatprep.subr.mxu0 0.0
    %116 = vmatpush1.msra.mxu0 0.0
    %117 = vmatprep.subr.mxu0 0.0
    %118 = vmatpush1.msra.mxu0 0.0
    %119 = vmatprep.subr.mxu0 0.0
    %120 = vmatpush1.msra.mxu0 0.0
    %121 = vmatprep.subr.mxu0 0.0
    %122 = vmatpush1.msra.mxu0 0.0
    %123 = vmatprep.subr.mxu0 0.0
    %124 = vmatpush1.msra.mxu0 0.0
    %125 = vmatprep.subr.mxu0 0.0
    %126 = vmatpush1.msra.mxu0 0.0
    %127 = vmatprep.subr.mxu0 0.0
    %128 = vmatpush1.msra.mxu0 0.0
    %129 = vmatprep.subr.mxu0 0.0
    %130 = vmatpush1.msra.mxu0 0.0
    %131 = vmatprep.subr.mxu0 0.0
    %132 = vmatpush1.msra.mxu0 0.0
    %133 = vmatprep.subr.mxu0 0.0
    %134 = vmatpush1.msra.mxu0 0.0
    %135 = vmatprep.subr.mxu0 0.0
    %136 = vmatpush1.msra.mxu0 0.0
    %137 = vmatprep.subr.mxu0 0.0
    %138 = vmatpush1.msra.mxu0 0.0
    %139 = vmatprep.subr.mxu0 0.0
    %140 = vmatpush1.msra.mxu0 0.0
    %141 = vmatprep.mubr.f32.mxu0 0.0
    %142 = vmatmul.mubr.f32.gmra.mrb[0].mxu0 %v72
    %v143 = vpop.f32.mrb[0].mxu0
    %v144 = vadd.f32 %v68, %v143
    %v145 = vpop.f32.mrb[0].mxu0
    %146 = vmatprep.mubr.f32.mxu0 0.0
    %147 = vmatmul.mubr.f32.gmra.mrb[0].mxu0 %v75
    %v148 = vpop.f32.mrb[0].mxu0
    %v149 = vadd.f32 %v68, %v148
    %v150 = vpop.f32.mrb[0].mxu0
    %151 = vdwg.mxu0
    %152 = vst [vmem:[#allocation2] sm:$0xff] %v144
    %153 = vst [vmem:[#allocation2 + $0x8] sm:$0xff] %v149
    %v154 = vld [vmem:[#allocation8] sm:$0xff]
    %v155 = vld [vmem:[#allocation8 + $0x8] sm:$0xff]
    %v156 = vld [vmem:[#allocation8 + $0x10] sm:$0xff]
    %v157 = vld [vmem:[#allocation8 + $0x18] sm:$0xff]
    %v158 = vld [vmem:[#allocation2] sm:$0x3]
    %vm159 = vcmask 261120
    %v161 = vsel %vm159, 0.0, 0
    %163 = vmatprep.subr.mxu0 0.0
    %164 = vmatpush1.msra.mxu0 %v154
    %165 = vmatprep.subr.mxu0 0.0
    %166 = vmatpush1.msra.mxu0 %v155
    %167 = vmatprep.subr.mxu0 0.0
    %168 = vmatpush1.msra.mxu0 %v156
    %169 = vmatprep.subr.mxu0 0.0
    %170 = vmatpush1.msra.mxu0 %v157
    %171 = vmatprep.subr.mxu0 0.0
    %172 = vmatpush1.msra.mxu0 0.0
    %173 = vmatprep.subr.mxu0 0.0
    %174 = vmatpush1.msra.mxu0 0.0
    %175 = vmatprep.subr.mxu0 0.0
    %176 = vmatpush1.msra.mxu0 0.0
    %177 = vmatprep.subr.mxu0 0.0
    %178 = vmatpush1.msra.mxu0 0.0
    %179 = vmatprep.subr.mxu0 0.0
    %180 = vmatpush1.msra.mxu0 0.0
    %181 = vmatprep.subr.mxu0 0.0
    %182 = vmatpush1.msra.mxu0 0.0
    %183 = vmatprep.subr.mxu0 0.0
    %184 = vmatpush1.msra.mxu0 0.0
    %185 = vmatprep.subr.mxu0 0.0
    %186 = vmatpush1.msra.mxu0 0.0
    %187 = vmatprep.subr.mxu0 0.0
    %188 = vmatpush1.msra.mxu0 0.0
    %189 = vmatprep.subr.mxu0 0.0
    %190 = vmatpush1.msra.mxu0 0.0
    %191 = vmatprep.subr.mxu0 0.0
    %192 = vmatpush1.msra.mxu0 0.0
    %193 = vmatprep.subr.mxu0 0.0
    %194 = vmatpush1.msra.mxu0 0.0
    %195 = vmatprep.subr.mxu0 0.0
    %196 = vmatpush1.msra.mxu0 0.0
    %197 = vmatprep.subr.mxu0 0.0
    %198 = vmatpush1.msra.mxu0 0.0
    %199 = vmatprep.subr.mxu0 0.0
    %200 = vmatpush1.msra.mxu0 0.0
    %201 = vmatprep.subr.mxu0 0.0
    %202 = vmatpush1.msra.mxu0 0.0
    %203 = vmatprep.subr.mxu0 0.0
    %204 = vmatpush1.msra.mxu0 0.0
    %205 = vmatprep.subr.mxu0 0.0
    %206 = vmatpush1.msra.mxu0 0.0
    %207 = vmatprep.subr.mxu0 0.0
    %208 = vmatpush1.msra.mxu0 0.0
    %209 = vmatprep.subr.mxu0 0.0
    %210 = vmatpush1.msra.mxu0 0.0
    %211 = vmatprep.subr.mxu0 0.0
    %212 = vmatpush1.msra.mxu0 0.0
    %213 = vmatprep.subr.mxu0 0.0
    %214 = vmatpush1.msra.mxu0 0.0
    %215 = vmatprep.subr.mxu0 0.0
    %216 = vmatpush1.msra.mxu0 0.0
    %217 = vmatprep.subr.mxu0 0.0
    %218 = vmatpush1.msra.mxu0 0.0
    %219 = vmatprep.subr.mxu0 0.0
    %220 = vmatpush1.msra.mxu0 0.0
    %221 = vmatprep.subr.mxu0 0.0
    %222 = vmatpush1.msra.mxu0 0.0
    %223 = vmatprep.subr.mxu0 0.0
    %224 = vmatpush1.msra.mxu0 0.0
    %225 = vmatprep.subr.mxu0 0.0
    %226 = vmatpush1.msra.mxu0 0.0
    %227 = vmatprep.mubr.f32.mxu0 0.0
    %228 = vmatmul.mubr.f32.gmra.mrb[0].mxu0 %v161
    %v229 = vpop.f32.mrb[0].mxu0
    %v230 = vadd.f32 0.0, %v229
    %v231 = vpop.f32.mrb[0].mxu0
    %232 = vdwg.mxu0
    %v233 = vadd.f32 %v158, %v230
    %v234 = vxor.u32 %v233, 2147483648
    %v235 = vmul.f32 %v234, 1.442695
    %v236 = vpow.pop %v235
    %v237 = vadd.f32 %v236, 1.0
    %v238 = vrcp.pop %v237
    %v239 = vmul.f32 1.0, %v238
    %v240 = vtanh.pop %v233
    %v241 = vmul.f32 %v239, 0.0
    %243 = vrot.lane.b32.xlu0 %v240, 32
    %v244 = vpop.permute.xlu0 %243
    %v246 = vmul.f32 %v239, %v244
    %248 = vrot.lane.b32.xlu0 %v246, 32
    %v249 = vpop.permute.xlu0 %248
    %v251 = vadd.f32 %v241, %v249
    %v252 = vtanh.pop %v251
    %254 = vrot.lane.b32.xlu0 %v252, 32
    %v255 = vpop.permute.xlu0 %254
    %v257 = vmul.f32 %v239, %v255
    %s258 = scalar_lea.vmem [#allocation2], 2
    %v259 = vld [vmem:[%s258] sm:$0x3]
    %261 = vrot.lane.b32.xlu0 %v257, 64
    %v262 = vpop.permute.xlu0 %261
    %v263 = vsel %vm159, %v262, 0
    %265 = vmatprep.subr.mxu0 0.0
    %266 = vmatpush1.msra.mxu0 %v154
    %267 = vmatprep.subr.mxu0 0.0
    %268 = vmatpush1.msra.mxu0 %v155
    %269 = vmatprep.subr.mxu0 0.0
    %270 = vmatpush1.msra.mxu0 %v156
    %271 = vmatprep.subr.mxu0 0.0
    %272 = vmatpush1.msra.mxu0 %v157
    %273 = vmatprep.subr.mxu0 0.0
    %274 = vmatpush1.msra.mxu0 0.0
    %275 = vmatprep.subr.mxu0 0.0
    %276 = vmatpush1.msra.mxu0 0.0
    %277 = vmatprep.subr.mxu0 0.0
    %278 = vmatpush1.msra.mxu0 0.0
    %279 = vmatprep.subr.mxu0 0.0
    %280 = vmatpush1.msra.mxu0 0.0
    %281 = vmatprep.subr.mxu0 0.0
    %282 = vmatpush1.msra.mxu0 0.0
    %283 = vmatprep.subr.mxu0 0.0
    %284 = vmatpush1.msra.mxu0 0.0
    %285 = vmatprep.subr.mxu0 0.0
    %286 = vmatpush1.msra.mxu0 0.0
    %287 = vmatprep.subr.mxu0 0.0
    %288 = vmatpush1.msra.mxu0 0.0
    %289 = vmatprep.subr.mxu0 0.0
    %290 = vmatpush1.msra.mxu0 0.0
    %291 = vmatprep.subr.mxu0 0.0
    %292 = vmatpush1.msra.mxu0 0.0
    %293 = vmatprep.subr.mxu0 0.0
    %294 = vmatpush1.msra.mxu0 0.0
    %295 = vmatprep.subr.mxu0 0.0
    %296 = vmatpush1.msra.mxu0 0.0
    %297 = vmatprep.subr.mxu0 0.0
    %298 = vmatpush1.msra.mxu0 0.0
    %299 = vmatprep.subr.mxu0 0.0
    %300 = vmatpush1.msra.mxu0 0.0
    %301 = vmatprep.subr.mxu0 0.0
    %302 = vmatpush1.msra.mxu0 0.0
    %303 = vmatprep.subr.mxu0 0.0
    %304 = vmatpush1.msra.mxu0 0.0
    %305 = vmatprep.subr.mxu0 0.0
    %306 = vmatpush1.msra.mxu0 0.0
    %307 = vmatprep.subr.mxu0 0.0
    %308 = vmatpush1.msra.mxu0 0.0
    %309 = vmatprep.subr.mxu0 0.0
    %310 = vmatpush1.msra.mxu0 0.0
    %311 = vmatprep.subr.mxu0 0.0
    %312 = vmatpush1.msra.mxu0 0.0
    %313 = vmatprep.subr.mxu0 0.0
    %314 = vmatpush1.msra.mxu0 0.0
    %315 = vmatprep.subr.mxu0 0.0
    %316 = vmatpush1.msra.mxu0 0.0
    %317 = vmatprep.subr.mxu0 0.0
    %318 = vmatpush1.msra.mxu0 0.0
    %319 = vmatprep.subr.mxu0 0.0
    %320 = vmatpush1.msra.mxu0 0.0
    %321 = vmatprep.subr.mxu0 0.0
    %322 = vmatpush1.msra.mxu0 0.0
    %323 = vmatprep.subr.mxu0 0.0
    %324 = vmatpush1.msra.mxu0 0.0
    %325 = vmatprep.subr.mxu0 0.0
    %326 = vmatpush1.msra.mxu0 0.0
    %327 = vmatprep.subr.mxu0 0.0
    %328 = vmatpush1.msra.mxu0 0.0
    %329 = vmatprep.mubr.f32.mxu0 0.0
    %330 = vmatmul.mubr.f32.gmra.mrb[0].mxu0 %v263
    %v331 = vpop.f32.mrb[0].mxu0
    %v332 = vadd.f32 0.0, %v331
    %v333 = vpop.f32.mrb[0].mxu0
    %334 = vdwg.mxu0
    %v335 = vadd.f32 %v259, %v332
    %v336 = vxor.u32 %v335, 2147483648
    %v337 = vmul.f32 %v336, 1.442695
    %v338 = vpow.pop %v337
    %v339 = vadd.f32 %v338, 1.0
    %v340 = vrcp.pop %v339
    %v341 = vmul.f32 1.0, %v340
    %v342 = vtanh.pop %v335
    %v343 = vmul.f32 %v341, %v251
    %345 = vrot.lane.b32.xlu0 %v342, 32
    %v346 = vpop.permute.xlu0 %345
    %v348 = vmul.f32 %v341, %v346
    %350 = vrot.lane.b32.xlu0 %v348, 32
    %v351 = vpop.permute.xlu0 %350
    %v353 = vadd.f32 %v343, %v351
    %v354 = vtanh.pop %v353
    %356 = vrot.lane.b32.xlu0 %v354, 32
    %v357 = vpop.permute.xlu0 %356
    %v359 = vmul.f32 %v341, %v357
    %s360 = scalar_lea.vmem [#allocation2], 4
    %v361 = vld [vmem:[%s360] sm:$0x3]
    %363 = vrot.lane.b32.xlu0 %v359, 64
    %v364 = vpop.permute.xlu0 %363
    %v365 = vsel %vm159, %v364, 0
    %367 = vmatprep.subr.mxu0 0.0
    %368 = vmatpush1.msra.mxu0 %v154
    %369 = vmatprep.subr.mxu0 0.0
    %370 = vmatpush1.msra.mxu0 %v155
    %371 = vmatprep.subr.mxu0 0.0
    %372 = vmatpush1.msra.mxu0 %v156
    %373 = vmatprep.subr.mxu0 0.0
    %374 = vmatpush1.msra.mxu0 %v157
    %375 = vmatprep.subr.mxu0 0.0
    %376 = vmatpush1.msra.mxu0 0.0
    %377 = vmatprep.subr.mxu0 0.0
    %378 = vmatpush1.msra.mxu0 0.0
    %379 = vmatprep.subr.mxu0 0.0
    %380 = vmatpush1.msra.mxu0 0.0
    %381 = vmatprep.subr.mxu0 0.0
    %382 = vmatpush1.msra.mxu0 0.0
    %383 = vmatprep.subr.mxu0 0.0
    %384 = vmatpush1.msra.mxu0 0.0
    %385 = vmatprep.subr.mxu0 0.0
    %386 = vmatpush1.msra.mxu0 0.0
    %387 = vmatprep.subr.mxu0 0.0
    %388 = vmatpush1.msra.mxu0 0.0
    %389 = vmatprep.subr.mxu0 0.0
    %390 = vmatpush1.msra.mxu0 0.0
    %391 = vmatprep.subr.mxu0 0.0
    %392 = vmatpush1.msra.mxu0 0.0
    %393 = vmatprep.subr.mxu0 0.0
    %394 = vmatpush1.msra.mxu0 0.0
    %395 = vmatprep.subr.mxu0 0.0
    %396 = vmatpush1.msra.mxu0 0.0
    %397 = vmatprep.subr.mxu0 0.0
    %398 = vmatpush1.msra.mxu0 0.0
    %399 = vmatprep.subr.mxu0 0.0
    %400 = vmatpush1.msra.mxu0 0.0
    %401 = vmatprep.subr.mxu0 0.0
    %402 = vmatpush1.msra.mxu0 0.0
    %403 = vmatprep.subr.mxu0 0.0
    %404 = vmatpush1.msra.mxu0 0.0
    %405 = vmatprep.subr.mxu0 0.0
    %406 = vmatpush1.msra.mxu0 0.0
    %407 = vmatprep.subr.mxu0 0.0
    %408 = vmatpush1.msra.mxu0 0.0
    %409 = vmatprep.subr.mxu0 0.0
    %410 = vmatpush1.msra.mxu0 0.0
    %411 = vmatprep.subr.mxu0 0.0
    %412 = vmatpush1.msra.mxu0 0.0
    %413 = vmatprep.subr.mxu0 0.0
    %414 = vmatpush1.msra.mxu0 0.0
    %415 = vmatprep.subr.mxu0 0.0
    %416 = vmatpush1.msra.mxu0 0.0
    %417 = vmatprep.subr.mxu0 0.0
    %418 = vmatpush1.msra.mxu0 0.0
    %419 = vmatprep.subr.mxu0 0.0
    %420 = vmatpush1.msra.mxu0 0.0
    %421 = vmatprep.subr.mxu0 0.0
    %422 = vmatpush1.msra.mxu0 0.0
    %423 = vmatprep.subr.mxu0 0.0
    %424 = vmatpush1.msra.mxu0 0.0
    %425 = vmatprep.subr.mxu0 0.0
    %426 = vmatpush1.msra.mxu0 0.0
    %427 = vmatprep.subr.mxu0 0.0
    %428 = vmatpush1.msra.mxu0 0.0
    %429 = vmatprep.subr.mxu0 0.0
    %430 = vmatpush1.msra.mxu0 0.0
    %431 = vmatprep.mubr.f32.mxu0 0.0
    %432 = vmatmul.mubr.f32.gmra.mrb[0].mxu0 %v365
    %v433 = vpop.f32.mrb[0].mxu0
    %v434 = vadd.f32 0.0, %v433
    %v435 = vpop.f32.mrb[0].mxu0
    %436 = vdwg.mxu0
    %v437 = vadd.f32 %v361, %v434
    %v438 = vxor.u32 %v437, 2147483648
    %v439 = vmul.f32 %v438, 1.442695
    %v440 = vpow.pop %v439
    %v441 = vadd.f32 %v440, 1.0
    %v442 = vrcp.pop %v441
    %v443 = vmul.f32 1.0, %v442
    %v444 = vtanh.pop %v437
    %v445 = vmul.f32 %v443, %v353
    %447 = vrot.lane.b32.xlu0 %v444, 32
    %v448 = vpop.permute.xlu0 %447
    %v450 = vmul.f32 %v443, %v448
    %452 = vrot.lane.b32.xlu0 %v450, 32
    %v453 = vpop.permute.xlu0 %452
    %v455 = vadd.f32 %v445, %v453
    %v456 = vtanh.pop %v455
    %458 = vrot.lane.b32.xlu0 %v456, 32
    %v459 = vpop.permute.xlu0 %458
    %v461 = vmul.f32 %v443, %v459
    %s462 = scalar_lea.vmem [#allocation2], 6
    %v463 = vld [vmem:[%s462] sm:$0x3]
    %465 = vrot.lane.b32.xlu0 %v461, 64
    %v466 = vpop.permute.xlu0 %465
    %v467 = vsel %vm159, %v466, 0
    %469 = vmatprep.subr.mxu0 0.0
    %470 = vmatpush1.msra.mxu0 %v154
    %471 = vmatprep.subr.mxu0 0.0
    %472 = vmatpush1.msra.mxu0 %v155
    %473 = vmatprep.subr.mxu0 0.0
    %474 = vmatpush1.msra.mxu0 %v156
    %475 = vmatprep.subr.mxu0 0.0
    %476 = vmatpush1.msra.mxu0 %v157
    %477 = vmatprep.subr.mxu0 0.0
    %478 = vmatpush1.msra.mxu0 0.0
    %479 = vmatprep.subr.mxu0 0.0
    %480 = vmatpush1.msra.mxu0 0.0
    %481 = vmatprep.subr.mxu0 0.0
    %482 = vmatpush1.msra.mxu0 0.0
    %483 = vmatprep.subr.mxu0 0.0
    %484 = vmatpush1.msra.mxu0 0.0
    %485 = vmatprep.subr.mxu0 0.0
    %486 = vmatpush1.msra.mxu0 0.0
    %487 = vmatprep.subr.mxu0 0.0
    %488 = vmatpush1.msra.mxu0 0.0
    %489 = vmatprep.subr.mxu0 0.0
    %490 = vmatpush1.msra.mxu0 0.0
    %491 = vmatprep.subr.mxu0 0.0
    %492 = vmatpush1.msra.mxu0 0.0
    %493 = vmatprep.subr.mxu0 0.0
    %494 = vmatpush1.msra.mxu0 0.0
    %495 = vmatprep.subr.mxu0 0.0
    %496 = vmatpush1.msra.mxu0 0.0
    %497 = vmatprep.subr.mxu0 0.0
    %498 = vmatpush1.msra.mxu0 0.0
    %499 = vmatprep.subr.mxu0 0.0
    %500 = vmatpush1.msra.mxu0 0.0
    %501 = vmatprep.subr.mxu0 0.0
    %502 = vmatpush1.msra.mxu0 0.0
    %503 = vmatprep.subr.mxu0 0.0
    %504 = vmatpush1.msra.mxu0 0.0
    %505 = vmatprep.subr.mxu0 0.0
    %506 = vmatpush1.msra.mxu0 0.0
    %507 = vmatprep.subr.mxu0 0.0
    %508 = vmatpush1.msra.mxu0 0.0
    %509 = vmatprep.subr.mxu0 0.0
    %510 = vmatpush1.msra.mxu0 0.0
    %511 = vmatprep.subr.mxu0 0.0
    %512 = vmatpush1.msra.mxu0 0.0
    %513 = vmatprep.subr.mxu0 0.0
    %514 = vmatpush1.msra.mxu0 0.0
    %515 = vmatprep.subr.mxu0 0.0
    %516 = vmatpush1.msra.mxu0 0.0
    %517 = vmatprep.subr.mxu0 0.0
    %518 = vmatpush1.msra.mxu0 0.0
    %519 = vmatprep.subr.mxu0 0.0
    %520 = vmatpush1.msra.mxu0 0.0
    %521 = vmatprep.subr.mxu0 0.0
    %522 = vmatpush1.msra.mxu0 0.0
    %523 = vmatprep.subr.mxu0 0.0
    %524 = vmatpush1.msra.mxu0 0.0
    %525 = vmatprep.subr.mxu0 0.0
    %526 = vmatpush1.msra.mxu0 0.0
    %527 = vmatprep.subr.mxu0 0.0
    %528 = vmatpush1.msra.mxu0 0.0
    %529 = vmatprep.subr.mxu0 0.0
    %530 = vmatpush1.msra.mxu0 0.0
    %531 = vmatprep.subr.mxu0 0.0
    %532 = vmatpush1.msra.mxu0 0.0
    %533 = vmatprep.mubr.f32.mxu0 0.0
    %534 = vmatmul.mubr.f32.gmra.mrb[0].mxu0 %v467
    %v535 = vpop.f32.mrb[0].mxu0
    %v536 = vadd.f32 0.0, %v535
    %v537 = vpop.f32.mrb[0].mxu0
    %538 = vdwg.mxu0
    %v539 = vadd.f32 %v463, %v536
    %v540 = vxor.u32 %v539, 2147483648
    %v541 = vmul.f32 %v540, 1.442695
    %v542 = vpow.pop %v541
    %v543 = vadd.f32 %v542, 1.0
    %v544 = vrcp.pop %v543
    %v545 = vmul.f32 1.0, %v544
    %v546 = vtanh.pop %v539
    %v547 = vmul.f32 %v545, %v455
    %549 = vrot.lane.b32.xlu0 %v546, 32
    %v550 = vpop.permute.xlu0 %549
    %v552 = vmul.f32 %v545, %v550
    %554 = vrot.lane.b32.xlu0 %v552, 32
    %v555 = vpop.permute.xlu0 %554
    %v557 = vadd.f32 %v547, %v555
    %v558 = vtanh.pop %v557
    %560 = vrot.lane.b32.xlu0 %v558, 32
    %v561 = vpop.permute.xlu0 %560
    %v563 = vmul.f32 %v545, %v561
    %s564 = scalar_lea.vmem [#allocation2], 8
    %v565 = vld [vmem:[%s564] sm:$0x3]
    %567 = vrot.lane.b32.xlu0 %v563, 64
    %v568 = vpop.permute.xlu0 %567
    %v569 = vsel %vm159, %v568, 0
    %571 = vmatprep.subr.mxu0 0.0
    %572 = vmatpush1.msra.mxu0 %v154
    %573 = vmatprep.subr.mxu0 0.0
    %574 = vmatpush1.msra.mxu0 %v155
    %575 = vmatprep.subr.mxu0 0.0
    %576 = vmatpush1.msra.mxu0 %v156
    %577 = vmatprep.subr.mxu0 0.0
    %578 = vmatpush1.msra.mxu0 %v157
    %579 = vmatprep.subr.mxu0 0.0
    %580 = vmatpush1.msra.mxu0 0.0
    %581 = vmatprep.subr.mxu0 0.0
    %582 = vmatpush1.msra.mxu0 0.0
    %583 = vmatprep.subr.mxu0 0.0
    %584 = vmatpush1.msra.mxu0 0.0
    %585 = vmatprep.subr.mxu0 0.0
    %586 = vmatpush1.msra.mxu0 0.0
    %587 = vmatprep.subr.mxu0 0.0
    %588 = vmatpush1.msra.mxu0 0.0
    %589 = vmatprep.subr.mxu0 0.0
    %590 = vmatpush1.msra.mxu0 0.0
    %591 = vmatprep.subr.mxu0 0.0
    %592 = vmatpush1.msra.mxu0 0.0
    %593 = vmatprep.subr.mxu0 0.0
    %594 = vmatpush1.msra.mxu0 0.0
    %595 = vmatprep.subr.mxu0 0.0
    %596 = vmatpush1.msra.mxu0 0.0
    %597 = vmatprep.subr.mxu0 0.0
    %598 = vmatpush1.msra.mxu0 0.0
    %599 = vmatprep.subr.mxu0 0.0
    %600 = vmatpush1.msra.mxu0 0.0
    %601 = vmatprep.subr.mxu0 0.0
    %602 = vmatpush1.msra.mxu0 0.0
    %603 = vmatprep.subr.mxu0 0.0
    %604 = vmatpush1.msra.mxu0 0.0
    %605 = vmatprep.subr.mxu0 0.0
    %606 = vmatpush1.msra.mxu0 0.0
    %607 = vmatprep.subr.mxu0 0.0
    %608 = vmatpush1.msra.mxu0 0.0
    %609 = vmatprep.subr.mxu0 0.0
    %610 = vmatpush1.msra.mxu0 0.0
    %611 = vmatprep.subr.mxu0 0.0
    %612 = vmatpush1.msra.mxu0 0.0
    %613 = vmatprep.subr.mxu0 0.0
    %614 = vmatpush1.msra.mxu0 0.0
    %615 = vmatprep.subr.mxu0 0.0
    %616 = vmatpush1.msra.mxu0 0.0
    %617 = vmatprep.subr.mxu0 0.0
    %618 = vmatpush1.msra.mxu0 0.0
    %619 = vmatprep.subr.mxu0 0.0
    %620 = vmatpush1.msra.mxu0 0.0
    %621 = vmatprep.subr.mxu0 0.0
    %622 = vmatpush1.msra.mxu0 0.0
    %623 = vmatprep.subr.mxu0 0.0
    %624 = vmatpush1.msra.mxu0 0.0
    %625 = vmatprep.subr.mxu0 0.0
    %626 = vmatpush1.msra.mxu0 0.0
    %627 = vmatprep.subr.mxu0 0.0
    %628 = vmatpush1.msra.mxu0 0.0
    %629 = vmatprep.subr.mxu0 0.0
    %630 = vmatpush1.msra.mxu0 0.0
    %631 = vmatprep.subr.mxu0 0.0
    %632 = vmatpush1.msra.mxu0 0.0
    %633 = vmatprep.subr.mxu0 0.0
    %634 = vmatpush1.msra.mxu0 0.0
    %635 = vmatprep.mubr.f32.mxu0 0.0
    %636 = vmatmul.mubr.f32.gmra.mrb[0].mxu0 %v569
    %v637 = vpop.f32.mrb[0].mxu0
    %v638 = vadd.f32 0.0, %v637
    %v639 = vpop.f32.mrb[0].mxu0
    %640 = vdwg.mxu0
    %v641 = vadd.f32 %v565, %v638
    %v642 = vxor.u32 %v641, 2147483648
    %v643 = vmul.f32 %v642, 1.442695
    %v644 = vpow.pop %v643
    %v645 = vadd.f32 %v644, 1.0
    %v646 = vrcp.pop %v645
    %v647 = vmul.f32 1.0, %v646
    %v648 = vtanh.pop %v641
    %v649 = vmul.f32 %v647, %v557
    %651 = vrot.lane.b32.xlu0 %v648, 32
    %v652 = vpop.permute.xlu0 %651
    %v654 = vmul.f32 %v647, %v652
    %656 = vrot.lane.b32.xlu0 %v654, 32
    %v657 = vpop.permute.xlu0 %656
    %v659 = vadd.f32 %v649, %v657
    %v660 = vtanh.pop %v659
    %662 = vrot.lane.b32.xlu0 %v660, 32
    %v663 = vpop.permute.xlu0 %662
    %v665 = vmul.f32 %v647, %v663
    %s666 = scalar_lea.vmem [#allocation2], 10
    %v667 = vld [vmem:[%s666] sm:$0x3]
    %669 = vrot.lane.b32.xlu0 %v665, 64
    %v670 = vpop.permute.xlu0 %669
    %v671 = vsel %vm159, %v670, 0
    %673 = vmatprep.subr.mxu0 0.0
    %674 = vmatpush1.msra.mxu0 %v154
    %675 = vmatprep.subr.mxu0 0.0
    %676 = vmatpush1.msra.mxu0 %v155
    %677 = vmatprep.subr.mxu0 0.0
    %678 = vmatpush1.msra.mxu0 %v156
    %679 = vmatprep.subr.mxu0 0.0
    %680 = vmatpush1.msra.mxu0 %v157
    %681 = vmatprep.subr.mxu0 0.0
    %682 = vmatpush1.msra.mxu0 0.0
    %683 = vmatprep.subr.mxu0 0.0
    %684 = vmatpush1.msra.mxu0 0.0
    %685 = vmatprep.subr.mxu0 0.0
    %686 = vmatpush1.msra.mxu0 0.0
    %687 = vmatprep.subr.mxu0 0.0
    %688 = vmatpush1.msra.mxu0 0.0
    %689 = vmatprep.subr.mxu0 0.0
    %690 = vmatpush1.msra.mxu0 0.0
    %691 = vmatprep.subr.mxu0 0.0
    %692 = vmatpush1.msra.mxu0 0.0
    %693 = vmatprep.subr.mxu0 0.0
    %694 = vmatpush1.msra.mxu0 0.0
    %695 = vmatprep.subr.mxu0 0.0
    %696 = vmatpush1.msra.mxu0 0.0
    %697 = vmatprep.subr.mxu0 0.0
    %698 = vmatpush1.msra.mxu0 0.0
    %699 = vmatprep.subr.mxu0 0.0
    %700 = vmatpush1.msra.mxu0 0.0
    %701 = vmatprep.subr.mxu0 0.0
    %702 = vmatpush1.msra.mxu0 0.0
    %703 = vmatprep.subr.mxu0 0.0
    %704 = vmatpush1.msra.mxu0 0.0
    %705 = vmatprep.subr.mxu0 0.0
    %706 = vmatpush1.msra.mxu0 0.0
    %707 = vmatprep.subr.mxu0 0.0
    %708 = vmatpush1.msra.mxu0 0.0
    %709 = vmatprep.subr.mxu0 0.0
    %710 = vmatpush1.msra.mxu0 0.0
    %711 = vmatprep.subr.mxu0 0.0
    %712 = vmatpush1.msra.mxu0 0.0
    %713 = vmatprep.subr.mxu0 0.0
    %714 = vmatpush1.msra.mxu0 0.0
    %715 = vmatprep.subr.mxu0 0.0
    %716 = vmatpush1.msra.mxu0 0.0
    %717 = vmatprep.subr.mxu0 0.0
    %718 = vmatpush1.msra.mxu0 0.0
    %719 = vmatprep.subr.mxu0 0.0
    %720 = vmatpush1.msra.mxu0 0.0
    %721 = vmatprep.subr.mxu0 0.0
    %722 = vmatpush1.msra.mxu0 0.0
    %723 = vmatprep.subr.mxu0 0.0
    %724 = vmatpush1.msra.mxu0 0.0
    %725 = vmatprep.subr.mxu0 0.0
    %726 = vmatpush1.msra.mxu0 0.0
    %727 = vmatprep.subr.mxu0 0.0
    %728 = vmatpush1.msra.mxu0 0.0
    %729 = vmatprep.subr.mxu0 0.0
    %730 = vmatpush1.msra.mxu0 0.0
    %731 = vmatprep.subr.mxu0 0.0
    %732 = vmatpush1.msra.mxu0 0.0
    %733 = vmatprep.subr.mxu0 0.0
    %734 = vmatpush1.msra.mxu0 0.0
    %735 = vmatprep.subr.mxu0 0.0
    %736 = vmatpush1.msra.mxu0 0.0
    %737 = vmatprep.mubr.f32.mxu0 0.0
    %738 = vmatmul.mubr.f32.gmra.mrb[0].mxu0 %v671
    %v739 = vpop.f32.mrb[0].mxu0
    %v740 = vadd.f32 0.0, %v739
    %v741 = vpop.f32.mrb[0].mxu0
    %742 = vdwg.mxu0
    %v743 = vadd.f32 %v667, %v740
    %v744 = vxor.u32 %v743, 2147483648
    %v745 = vmul.f32 %v744, 1.442695
    %v746 = vpow.pop %v745
    %v747 = vadd.f32 %v746, 1.0
    %v748 = vrcp.pop %v747
    %v749 = vmul.f32 1.0, %v748
    %v750 = vtanh.pop %v743
    %v751 = vmul.f32 %v749, %v659
    %753 = vrot.lane.b32.xlu0 %v750, 32
    %v754 = vpop.permute.xlu0 %753
    %v756 = vmul.f32 %v749, %v754
    %758 = vrot.lane.b32.xlu0 %v756, 32
    %v759 = vpop.permute.xlu0 %758
    %v761 = vadd.f32 %v751, %v759
    %v762 = vtanh.pop %v761
    %764 = vrot.lane.b32.xlu0 %v762, 32
    %v765 = vpop.permute.xlu0 %764
    %v767 = vmul.f32 %v749, %v765
    %s768 = scalar_lea.vmem [#allocation2], 12
    %v769 = vld [vmem:[%s768] sm:$0x3]
    %771 = vrot.lane.b32.xlu0 %v767, 64
    %v772 = vpop.permute.xlu0 %771
    %v773 = vsel %vm159, %v772, 0
    %775 = vmatprep.subr.mxu0 0.0
    %776 = vmatpush1.msra.mxu0 %v154
    %777 = vmatprep.subr.mxu0 0.0
    %778 = vmatpush1.msra.mxu0 %v155
    %779 = vmatprep.subr.mxu0 0.0
    %780 = vmatpush1.msra.mxu0 %v156
    %781 = vmatprep.subr.mxu0 0.0
    %782 = vmatpush1.msra.mxu0 %v157
    %783 = vmatprep.subr.mxu0 0.0
    %784 = vmatpush1.msra.mxu0 0.0
    %785 = vmatprep.subr.mxu0 0.0
    %786 = vmatpush1.msra.mxu0 0.0
    %787 = vmatprep.subr.mxu0 0.0
    %788 = vmatpush1.msra.mxu0 0.0
    %789 = vmatprep.subr.mxu0 0.0
    %790 = vmatpush1.msra.mxu0 0.0
    %791 = vmatprep.subr.mxu0 0.0
    %792 = vmatpush1.msra.mxu0 0.0
    %793 = vmatprep.subr.mxu0 0.0
    %794 = vmatpush1.msra.mxu0 0.0
    %795 = vmatprep.subr.mxu0 0.0
    %796 = vmatpush1.msra.mxu0 0.0
    %797 = vmatprep.subr.mxu0 0.0
    %798 = vmatpush1.msra.mxu0 0.0
    %799 = vmatprep.subr.mxu0 0.0
    %800 = vmatpush1.msra.mxu0 0.0
    %801 = vmatprep.subr.mxu0 0.0
    %802 = vmatpush1.msra.mxu0 0.0
    %803 = vmatprep.subr.mxu0 0.0
    %804 = vmatpush1.msra.mxu0 0.0
    %805 = vmatprep.subr.mxu0 0.0
    %806 = vmatpush1.msra.mxu0 0.0
    %807 = vmatprep.subr.mxu0 0.0
    %808 = vmatpush1.msra.mxu0 0.0
    %809 = vmatprep.subr.mxu0 0.0
    %810 = vmatpush1.msra.mxu0 0.0
    %811 = vmatprep.subr.mxu0 0.0
    %812 = vmatpush1.msra.mxu0 0.0
    %813 = vmatprep.subr.mxu0 0.0
    %814 = vmatpush1.msra.mxu0 0.0
    %815 = vmatprep.subr.mxu0 0.0
    %816 = vmatpush1.msra.mxu0 0.0
    %817 = vmatprep.subr.mxu0 0.0
    %818 = vmatpush1.msra.mxu0 0.0
    %819 = vmatprep.subr.mxu0 0.0
    %820 = vmatpush1.msra.mxu0 0.0
    %821 = vmatprep.subr.mxu0 0.0
    %822 = vmatpush1.msra.mxu0 0.0
    %823 = vmatprep.subr.mxu0 0.0
    %824 = vmatpush1.msra.mxu0 0.0
    %825 = vmatprep.subr.mxu0 0.0
    %826 = vmatpush1.msra.mxu0 0.0
    %827 = vmatprep.subr.mxu0 0.0
    %828 = vmatpush1.msra.mxu0 0.0
    %829 = vmatprep.subr.mxu0 0.0
    %830 = vmatpush1.msra.mxu0 0.0
    %831 = vmatprep.subr.mxu0 0.0
    %832 = vmatpush1.msra.mxu0 0.0
    %833 = vmatprep.subr.mxu0 0.0
    %834 = vmatpush1.msra.mxu0 0.0
    %835 = vmatprep.subr.mxu0 0.0
    %836 = vmatpush1.msra.mxu0 0.0
    %837 = vmatprep.subr.mxu0 0.0
    %838 = vmatpush1.msra.mxu0 0.0
    %839 = vmatprep.mubr.f32.mxu0 0.0
    %840 = vmatmul.mubr.f32.gmra.mrb[0].mxu0 %v773
    %v841 = vpop.f32.mrb[0].mxu0
    %v842 = vadd.f32 0.0, %v841
    %v843 = vpop.f32.mrb[0].mxu0
    %844 = vdwg.mxu0
    %v845 = vadd.f32 %v769, %v842
    %v846 = vxor.u32 %v845, 2147483648
    %v847 = vmul.f32 %v846, 1.442695
    %v848 = vpow.pop %v847
    %v849 = vadd.f32 %v848, 1.0
    %v850 = vrcp.pop %v849
    %v851 = vmul.f32 1.0, %v850
    %v852 = vtanh.pop %v845
    %v853 = vmul.f32 %v851, %v761
    %855 = vrot.lane.b32.xlu0 %v852, 32
    %v856 = vpop.permute.xlu0 %855
    %v858 = vmul.f32 %v851, %v856
    %860 = vrot.lane.b32.xlu0 %v858, 32
    %v861 = vpop.permute.xlu0 %860
    %v863 = vadd.f32 %v853, %v861
    %v864 = vtanh.pop %v863
    %866 = vrot.lane.b32.xlu0 %v864, 32
    %v867 = vpop.permute.xlu0 %866
    %v869 = vmul.f32 %v851, %v867
    %s870 = scalar_lea.vmem [#allocation2], 14
    %v871 = vld [vmem:[%s870] sm:$0x3]
    %873 = vrot.lane.b32.xlu0 %v869, 64
    %v874 = vpop.permute.xlu0 %873
    %v875 = vsel %vm159, %v874, 0
    %877 = vmatprep.subr.mxu0 0.0
    %878 = vmatpush1.msra.mxu0 %v154
    %879 = vmatprep.subr.mxu0 0.0
    %880 = vmatpush1.msra.mxu0 %v155
    %881 = vmatprep.subr.mxu0 0.0
    %882 = vmatpush1.msra.mxu0 %v156
    %883 = vmatprep.subr.mxu0 0.0
    %884 = vmatpush1.msra.mxu0 %v157
    %885 = vmatprep.subr.mxu0 0.0
    %886 = vmatpush1.msra.mxu0 0.0
    %887 = vmatprep.subr.mxu0 0.0
    %888 = vmatpush1.msra.mxu0 0.0
    %889 = vmatprep.subr.mxu0 0.0
    %890 = vmatpush1.msra.mxu0 0.0
    %891 = vmatprep.subr.mxu0 0.0
    %892 = vmatpush1.msra.mxu0 0.0
    %893 = vmatprep.subr.mxu0 0.0
    %894 = vmatpush1.msra.mxu0 0.0
    %895 = vmatprep.subr.mxu0 0.0
    %896 = vmatpush1.msra.mxu0 0.0
    %897 = vmatprep.subr.mxu0 0.0
    %898 = vmatpush1.msra.mxu0 0.0
    %899 = vmatprep.subr.mxu0 0.0
    %900 = vmatpush1.msra.mxu0 0.0
    %901 = vmatprep.subr.mxu0 0.0
    %902 = vmatpush1.msra.mxu0 0.0
    %903 = vmatprep.subr.mxu0 0.0
    %904 = vmatpush1.msra.mxu0 0.0
    %905 = vmatprep.subr.mxu0 0.0
    %906 = vmatpush1.msra.mxu0 0.0
    %907 = vmatprep.subr.mxu0 0.0
    %908 = vmatpush1.msra.mxu0 0.0
    %909 = vmatprep.subr.mxu0 0.0
    %910 = vmatpush1.msra.mxu0 0.0
    %911 = vmatprep.subr.mxu0 0.0
    %912 = vmatpush1.msra.mxu0 0.0
    %913 = vmatprep.subr.mxu0 0.0
    %914 = vmatpush1.msra.mxu0 0.0
    %915 = vmatprep.subr.mxu0 0.0
    %916 = vmatpush1.msra.mxu0 0.0
    %917 = vmatprep.subr.mxu0 0.0
    %918 = vmatpush1.msra.mxu0 0.0
    %919 = vmatprep.subr.mxu0 0.0
    %920 = vmatpush1.msra.mxu0 0.0
    %921 = vmatprep.subr.mxu0 0.0
    %922 = vmatpush1.msra.mxu0 0.0
    %923 = vmatprep.subr.mxu0 0.0
    %924 = vmatpush1.msra.mxu0 0.0
    %925 = vmatprep.subr.mxu0 0.0
    %926 = vmatpush1.msra.mxu0 0.0
    %927 = vmatprep.subr.mxu0 0.0
    %928 = vmatpush1.msra.mxu0 0.0
    %929 = vmatprep.subr.mxu0 0.0
    %930 = vmatpush1.msra.mxu0 0.0
    %931 = vmatprep.subr.mxu0 0.0
    %932 = vmatpush1.msra.mxu0 0.0
    %933 = vmatprep.subr.mxu0 0.0
    %934 = vmatpush1.msra.mxu0 0.0
    %935 = vmatprep.subr.mxu0 0.0
    %936 = vmatpush1.msra.mxu0 0.0
    %937 = vmatprep.subr.mxu0 0.0
    %938 = vmatpush1.msra.mxu0 0.0
    %939 = vmatprep.subr.mxu0 0.0
    %940 = vmatpush1.msra.mxu0 0.0
    %941 = vmatprep.mubr.f32.mxu0 0.0
    %942 = vmatmul.mubr.f32.gmra.mrb[0].mxu0 %v875
    %v943 = vpop.f32.mrb[0].mxu0
    %v944 = vadd.f32 0.0, %v943
    %v945 = vpop.f32.mrb[0].mxu0
    %946 = vdwg.mxu0
    %v947 = vadd.f32 %v871, %v944
    %v948 = vxor.u32 %v947, 2147483648
    %v949 = vmul.f32 %v948, 1.442695
    %v950 = vpow.pop %v949
    %v951 = vadd.f32 %v950, 1.0
    %v952 = vrcp.pop %v951
    %v953 = vmul.f32 1.0, %v952
    %v954 = vtanh.pop %v947
    %v955 = vmul.f32 %v953, %v863
    %957 = vrot.lane.b32.xlu0 %v954, 32
    %v958 = vpop.permute.xlu0 %957
    %v960 = vmul.f32 %v953, %v958
    %962 = vrot.lane.b32.xlu0 %v960, 32
    %v963 = vpop.permute.xlu0 %962
    %v965 = vadd.f32 %v955, %v963
    %v966 = vtanh.pop %v965
    %968 = vrot.lane.b32.xlu0 %v966, 32
    %v969 = vpop.permute.xlu0 %968
    %v971 = vmul.f32 %v953, %v969
    %973 = vrot.lane.b32.xlu0 %v971, 64
    %v974 = vpop.permute.xlu0 %973
    %vm976 = vcmask 254976
    %977 = vst.msk [vmem:[#allocation9] sm:$0x3] %vm976, %v974
    // Predicated region
    $region30: #{tpu_custom_call.1} parent=1 // pred_check
      _
    $region31: #{tpu_custom_call.1} parent=1 // pred_check_branch
      %979 = sbr.rel (0) target = $region33
    $region32: #{tpu_custom_call.1} parent=1 // pred_region
      %s981 = ssub.s32 32, 32
      %982 = vsyncadd [#allocation5], %s981
      %s984 = sshll.u32 [#allocation9], 4
      %s985 = int_to_ptr.vmem [resolvable:$true] %s984
      %987 = dma.vmem_to_hbm [thread:$0]  %s985, 32, %s4, [#allocation5]
    $region33: #{tpu_custom_call.1} parent=1 // pred_fallthru
      _
    // Predicated region
    $region34: #{tpu_custom_call.1} parent=1 // pred_check
      _
    $region35: #{tpu_custom_call.1} parent=1 // pred_check_branch
      %989 = sbr.rel (0) target = $region37
    $region36: #{tpu_custom_call.1} parent=1 // pred_region
      %990 = dma.done [#allocation5], 32
    $region37: #{tpu_custom_call.1} parent=1 // pred_fallthru
      _
    %991 = vsyncpa [#allocation4], 1
    %992 = vsyncpa [#allocation7], 1
    %993 = vsyncpa [#allocation5], 1

</llo_original>
